<compile_context>
chip_gen: v7x
topology: tpu7x:2x2x1
jax: 0.10.0
libtpu: 0.0.40
codegen_flags: <defaults>
</compile_context>

<pallas_src>
import functools

import jax
import jax.numpy as jnp
from jax.experimental import pallas as pl
from jax.experimental.pallas import tpu as pltpu


# --------------------------------------------------------------------------- #
# Kernel                                                                      #
# --------------------------------------------------------------------------- #
def _siamese_kernel(x_ref, w1_ref, t1_ref, w2_ref, t2_ref,
                    w3_ref, b3_ref, w4_ref, b4_ref, w5_ref, b5_ref,
                    out_ref, *, c2):
    """One siamese branch per grid step; all heavy lifting is 5 MXU matmuls.

    Layouts (all 2-D, batch on sublanes, everything else lane-dense):
      x  : (B, F)
      h1 : (B, L1*C1)      lane index = l*C1 + c   (channels-last conv1 output)
      h2 : (B, L2*C2)      lane index = l*C2 + d   (channels-last conv2 output)
      m  : (B, (L2-1)*C2)  pairwise max of adjacent positions; odd-position
                           lanes are dead and dropped by zero rows of w3.
    """
    x = x_ref[0]                                                      # (B, F)

    # layer1: Conv1d(1, C1, K) + BatchNorm + ReLU as one MXU matmul against a
    # precomputed banded operator (BN scale + conv bias folded in).
    h1 = jnp.dot(x, w1_ref[...], preferred_element_type=jnp.float32)
    h1 = jnp.maximum(h1 + t1_ref[...], 0.0)                           # (B, L1*C1)

    # layer2: Conv1d(C1, C2, K) + BatchNorm + ReLU, same trick.
    h2 = jnp.dot(h1, w2_ref[...], preferred_element_type=jnp.float32)
    h2 = jnp.maximum(h2 + t2_ref[...], 0.0)                           # (B, L2*C2)

    # MaxPool1d(2): max of each position with its right neighbour.  Keeping the
    # odd-position results is free because the matching rows of w3 are zero.
    m = jnp.maximum(h2[:, :-c2], h2[:, c2:])                          # (B, (L2-1)*C2)

    # layer3: Linear -> ReLU -> Linear -> Linear.  The pool compaction and the
    # torch channel-major flatten are folded into w3's row layout (make_params).
    z = jnp.dot(m, w3_ref[...], preferred_element_type=jnp.float32) + b3_ref[...]
    z = jnp.maximum(z, 0.0)
    z = jnp.dot(z, w4_ref[...], preferred_element_type=jnp.float32) + b4_ref[...]
    z = jnp.dot(z, w5_ref[...], preferred_element_type=jnp.float32) + b5_ref[...]
    out_ref[0] = z.astype(out_ref.dtype)


# --------------------------------------------------------------------------- #
# Wrapper                                                                     #
# --------------------------------------------------------------------------- #
def build_siamese_forward(c2):
    kernel = functools.partial(_siamese_kernel, c2=c2)

    @jax.jit
    def siamese_forward(input1, input2, kparams):
        B, C, F = input1.shape
        assert C == 1
        H3 = kparams["b5"].shape[1]
        # Fuse both branches into ONE pallas_call: the branch axis becomes a
        # 2-element "parallel" grid (maps onto the two TensorCores on v7x, and
        # is a cheap 2-step loop on v5e/v6e).  Weights are whole-array VMEM
        # residents, DMA'd once for the whole call.
        x = jnp.stack([input1[:, 0, :], input2[:, 0, :]], axis=0)     # (2, B, F)
        args = (x,
                kparams["w1"], kparams["t1"], kparams["w2"], kparams["t2"],
                kparams["w3"], kparams["b3"], kparams["w4"], kparams["b4"],
                kparams["w5"], kparams["b5"])
        wspec = pl.BlockSpec(memory_space=pltpu.MemorySpace.VMEM)
        out = pl.pallas_call(
            kernel,
            out_shape=jax.ShapeDtypeStruct((2, B, H3), jnp.float32),
            grid=(2,),
            in_specs=[pl.BlockSpec((1, B, F), lambda i: (i, 0, 0))] + [wspec] * 10,
            out_specs=pl.BlockSpec((1, B, H3), lambda i: (i, 0, 0)),
            compiler_params=pltpu.CompilerParams(
                dimension_semantics=("parallel",)),
        )(*args)
        return out[0], out[1]

    return siamese_forward


# --------------------------------------------------------------------------- #
# Parameter construction (all folding / banding done here, once, off the hot  #
# path)                                                                       #
# --------------------------------------------------------------------------- #
def make_params(key, first_c, second_c, linear_input, kernel_size, feature_len):
    C1, C2, K, F = first_c, second_c, kernel_size, feature_len
    L1 = F - K + 1
    L2 = L1 - K + 1
    Lp = L2 // 2
    flat = C2 * Lp
    H1, H2, H3 = linear_input, linear_input // 2, 256
    eps = 1e-5
    ks = jax.random.split(key, 18)

    def n(i, shape, scale=0.2):
        return jax.random.normal(ks[i], shape, jnp.float32) * scale

    raw = dict(
        w1=n(0, (C1, K), 0.4), b1=n(1, (C1,), 0.1),
        g1=1.0 + n(2, (C1,), 0.1), be1=n(3, (C1,), 0.1),
        m1=n(4, (C1,), 0.1), v1=1.0 + jnp.abs(n(5, (C1,), 0.1)),
        w2=n(6, (C2, C1, K), 0.3), b2=n(7, (C2,), 0.1),
        g2=1.0 + n(8, (C2,), 0.1), be2=n(9, (C2,), 0.1),
        m2=n(10, (C2,), 0.1), v2=1.0 + jnp.abs(n(11, (C2,), 0.1)),
        w3=n(12, (flat, H1), 0.15), b3=n(13, (H1,), 0.05),
        w4=n(14, (H1, H2), 0.15), b4=n(15, (H2,), 0.05),
        w5=n(16, (H2, H3), 0.15), b5=n(17, (H3,), 0.05),
    )

    # --- fold BatchNorm (eval-mode running stats) + conv bias into weights ---
    s1 = raw["g1"] / jnp.sqrt(raw["v1"] + eps)                 # (C1,)
    shift1 = s1 * (raw["b1"] - raw["m1"]) + raw["be1"]         # (C1,)
    s2 = raw["g2"] / jnp.sqrt(raw["v2"] + eps)
    shift2 = s2 * (raw["b2"] - raw["m2"]) + raw["be2"]

    # --- conv1 as a banded (Toeplitz) matrix: (F,) -> (L1*C1,), lane = l*C1+c
    w1s = raw["w1"] * s1[:, None]                              # (C1, K)
    k1 = jnp.arange(F)[:, None] - jnp.arange(L1)[None, :]      # (F, L1) tap f-l
    valid1 = (k1 >= 0) & (k1 < K)
    band1 = jnp.where(valid1[:, :, None],
                      w1s.T[jnp.clip(k1, 0, K - 1)], 0.0)      # (F, L1, C1)
    W1 = band1.reshape(F, L1 * C1)
    T1 = jnp.tile(shift1, L1).reshape(1, L1 * C1)

    # --- conv2 as a banded matrix: (L1*C1,) -> (L2*C2,), lane = l*C2+d
    w2s = raw["w2"] * s2[:, None, None]                        # (C2, C1, K)
    w2t = jnp.transpose(w2s, (2, 1, 0))                        # (K, C1, C2)
    k2 = jnp.arange(L1)[:, None] - jnp.arange(L2)[None, :]     # (L1, L2)
    valid2 = (k2 >= 0) & (k2 < K)
    band2 = jnp.where(valid2[:, :, None, None],
                      w2t[jnp.clip(k2, 0, K - 1)], 0.0)        # (L1, L2, C1, C2)
    W2 = jnp.transpose(band2, (0, 2, 1, 3)).reshape(L1 * C1, L2 * C2)
    T2 = jnp.tile(shift2, L2).reshape(1, L2 * C2)

    # --- linear1 with MaxPool compaction + torch channel-major flatten folded
    #     into its rows: kernel input lane = l*C2 + d, l in [0, L2-1); rows for
    #     odd l are zero (dead lanes), rows for l = 2p carry w3[d*Lp + p, :].
    w3_cl = raw["w3"].reshape(C2, Lp, H1).transpose(1, 0, 2)   # (Lp, C2, H1)
    W3 = jnp.stack([w3_cl, jnp.zeros_like(w3_cl)], axis=1)     # (Lp, 2, C2, H1)
    W3 = W3.reshape(2 * Lp * C2, H1)[:(L2 - 1) * C2]

    kparams = dict(w1=W1, t1=T1, w2=W2, t2=T2,
                   w3=W3, b3=raw["b3"].reshape(1, H1),
                   w4=raw["w4"], b4=raw["b4"].reshape(1, H2),
                   w5=raw["w5"], b5=raw["b5"].reshape(1, H3))
    return raw, kparams


# --------------------------------------------------------------------------- #
# Pure-JAX references                                                         #
# --------------------------------------------------------------------------- #
def forward_once_torch_ref(x, raw, precision=None):
    """Torch-structured forward_once on (B, 1, F), eval-mode BatchNorm."""
    eps = 1e-5
    B = x.shape[0]
    xx = x[:, 0, :]
    C1, K = raw["w1"].shape
    C2 = raw["w2"].shape[0]
    F = xx.shape[1]
    L1 = F - K + 1
    L2 = L1 - K + 1
    Lp = L2 // 2
    h1 = jnp.zeros((B, C1, L1), jnp.float32)
    for k in range(K):
        h1 = h1 + xx[:, k:k + L1][:, None, :] * raw["w1"][None, :, k:k + 1]
    h1 = h1 + raw["b1"][None, :, None]
    h1 = (h1 - raw["m1"][None, :, None]) / jnp.sqrt(raw["v1"][None, :, None] + eps)
    h1 = jnp.maximum(h1 * raw["g1"][None, :, None] + raw["be1"][None, :, None], 0.0)
    h2 = jnp.zeros((B, C2, L2), jnp.float32)
    for k in range(K):
        h2 = h2 + jnp.einsum("bcl,dc->bdl", h1[:, :, k:k + L2],
                             raw["w2"][:, :, k], precision=precision)
    h2 = h2 + raw["b2"][None, :, None]
    h2 = (h2 - raw["m2"][None, :, None]) / jnp.sqrt(raw["v2"][None, :, None] + eps)
    h2 = jnp.maximum(h2 * raw["g2"][None, :, None] + raw["be2"][None, :, None], 0.0)
    pooled = jnp.max(h2[:, :, :2 * Lp].reshape(B, C2, Lp, 2), axis=-1)
    flat = pooled.reshape(B, C2 * Lp)                       # channel-major view
    z = jnp.maximum(jnp.dot(flat, raw["w3"], precision=precision) + raw["b3"], 0.0)
    z = jnp.dot(z, raw["w4"], precision=precision) + raw["b4"]
    return jnp.dot(z, raw["w5"], precision=precision) + raw["b5"]


def forward_once_folded_ref(xx, kp, c2, precision=None):
    """Same math as the Pallas kernel, in plain JAX (validates the folding)."""
    h1 = jnp.maximum(jnp.dot(xx, kp["w1"], precision=precision) + kp["t1"], 0.0)
    h2 = jnp.maximum(jnp.dot(h1, kp["w2"], precision=precision) + kp["t2"], 0.0)
    m = jnp.maximum(h2[:, :-c2], h2[:, c2:])
    z = jnp.maximum(jnp.dot(m, kp["w3"], precision=precision) + kp["b3"], 0.0)
    z = jnp.dot(z, kp["w4"], precision=precision) + kp["b4"]
    return jnp.dot(z, kp["w5"], precision=precision) + kp["b5"]


# --------------------------------------------------------------------------- #
# Main                                                                        #
# --------------------------------------------------------------------------- #
if __name__ == "__main__":
    firstLayOutChannel = 4
    secondLayOutChannel = 8
    linearInput = 32
    kernelSize = 3
    featureLength = 16
    batch = 2

    key = jax.random.PRNGKey(0)
    kp_key, k1, k2 = jax.random.split(key, 3)
    raw, kparams = make_params(kp_key, firstLayOutChannel, secondLayOutChannel,
                               linearInput, kernelSize, featureLength)

    input1 = jax.random.normal(k1, (batch, 1, featureLength), jnp.float32)
    input2 = jax.random.normal(k2, (batch, 1, featureLength), jnp.float32)

    siamese_forward = build_siamese_forward(secondLayOutChannel)
    out1, out2 = siamese_forward(input1, input2, kparams)
    jax.block_until_ready((out1, out2))

    assert out1.shape == (batch, 256) and out2.shape == (batch, 256)

    # 1) Validate the parameter folding (banded conv, BN fold, pool+flatten
    #    permutation) exactly, in plain JAX at full f32 precision.
    for x in (input1, input2):
        rt = forward_once_torch_ref(x, raw, precision="highest")
        rf = forward_once_folded_ref(x[:, 0, :], kparams, secondLayOutChannel,
                                     precision="highest")
        assert jnp.allclose(rt, rf, rtol=1e-4, atol=1e-4)

    # 2) Validate the Pallas kernel against the torch-structured reference.
    #    Tolerance leaves room for the MXU's default reduced-precision f32
    #    matmul passes inside the kernel (the exactness of the math
    #    restructuring is covered by check 1).
    ref1 = forward_once_torch_ref(input1, raw, precision="highest")
    ref2 = forward_once_torch_ref(input2, raw, precision="highest")
    assert jnp.allclose(out1, ref1, rtol=2e-2, atol=2e-2)
    assert jnp.allclose(out2, ref2, rtol=2e-2, atol=2e-2)

    print("KERNEL_OK")
</pallas_src>

<mosaic_0001>
module attributes {stable_mosaic.version = 11 : i64} {
  func.func @_siamese_kernel(%arg0: i32, %arg1: memref<1x2x16xf32, #tpu.memory_space<vmem>>, %arg2: memref<16x56xf32, #tpu.memory_space<vmem>>, %arg3: memref<1x56xf32, #tpu.memory_space<vmem>>, %arg4: memref<56x96xf32, #tpu.memory_space<vmem>>, %arg5: memref<1x96xf32, #tpu.memory_space<vmem>>, %arg6: memref<88x32xf32, #tpu.memory_space<vmem>>, %arg7: memref<1x32xf32, #tpu.memory_space<vmem>>, %arg8: memref<32x16xf32, #tpu.memory_space<vmem>>, %arg9: memref<1x16xf32, #tpu.memory_space<vmem>>, %arg10: memref<16x256xf32, #tpu.memory_space<vmem>>, %arg11: memref<1x256xf32, #tpu.memory_space<vmem>>, %arg12: memref<1x2x256xf32, #tpu.memory_space<vmem>>) attributes {dimension_semantics = [#tpu.dimension_semantics<parallel>], iteration_bounds = array<i64: 2>, scalar_prefetch = 0 : i64, scratch_operands = 0 : i64, tpu.core_type = #tpu.core_type<tc>, window_params = [{transform_indices = @transform_0, window_bounds = array<i64: 1, 2, 16>}, {pipeline_mode = #tpu.pipeline_mode<synchronous>, transform_indices = @transform_1, window_bounds = array<i64: 16, 56>}, {pipeline_mode = #tpu.pipeline_mode<synchronous>, transform_indices = @transform_2, window_bounds = array<i64: 1, 56>}, {pipeline_mode = #tpu.pipeline_mode<synchronous>, transform_indices = @transform_3, window_bounds = array<i64: 56, 96>}, {pipeline_mode = #tpu.pipeline_mode<synchronous>, transform_indices = @transform_4, window_bounds = array<i64: 1, 96>}, {pipeline_mode = #tpu.pipeline_mode<synchronous>, transform_indices = @transform_5, window_bounds = array<i64: 88, 32>}, {pipeline_mode = #tpu.pipeline_mode<synchronous>, transform_indices = @transform_6, window_bounds = array<i64: 1, 32>}, {pipeline_mode = #tpu.pipeline_mode<synchronous>, transform_indices = @transform_7, window_bounds = array<i64: 32, 16>}, {pipeline_mode = #tpu.pipeline_mode<synchronous>, transform_indices = @transform_8, window_bounds = array<i64: 1, 16>}, {pipeline_mode = #tpu.pipeline_mode<synchronous>, transform_indices = @transform_9, window_bounds = array<i64: 16, 256>}, {pipeline_mode = #tpu.pipeline_mode<synchronous>, transform_indices = @transform_10, window_bounds = array<i64: 1, 256>}, {transform_indices = @transform_11, window_bounds = array<i64: 1, 2, 256>}]} {
    %c0 = arith.constant 0 : index
    %c0_0 = arith.constant 0 : index
    %c0_1 = arith.constant 0 : index
    %0 = vector.load %arg1[%c0, %c0_0, %c0_1] : memref<1x2x16xf32, #tpu.memory_space<vmem>>, vector<1x2x16xf32>
    %1 = vector.shape_cast %0 : vector<1x2x16xf32> to vector<2x16xf32>
    %c0_2 = arith.constant 0 : index
    %c0_3 = arith.constant 0 : index
    %2 = vector.load %arg2[%c0_2, %c0_3] : memref<16x56xf32, #tpu.memory_space<vmem>>, vector<16x56xf32>
    %cst = arith.constant dense<0.000000e+00> : vector<2x56xf32>
    %3 = tpu.matmul %1, %2, %cst {dimension_numbers = #tpu.dot_dimension_numbers<[1], [0], [0], [1], [0, 0, 1, 1], [], []>} : vector<2x16xf32>, vector<16x56xf32>, vector<2x56xf32> -> vector<2x56xf32>
    %c0_4 = arith.constant 0 : index
    %c0_5 = arith.constant 0 : index
    %4 = vector.load %arg3[%c0_4, %c0_5] : memref<1x56xf32, #tpu.memory_space<vmem>>, vector<1x56xf32>
    %5 = vector.broadcast %4 : vector<1x56xf32> to vector<2x56xf32>
    %6 = arith.addf %3, %5 : vector<2x56xf32>
    %cst_6 = arith.constant 0.000000e+00 : f32
    %7 = vector.broadcast %cst_6 : f32 to vector<2x56xf32>
    %8 = arith.maximumf %6, %7 : vector<2x56xf32>
    %c0_7 = arith.constant 0 : index
    %c0_8 = arith.constant 0 : index
    %9 = vector.load %arg4[%c0_7, %c0_8] : memref<56x96xf32, #tpu.memory_space<vmem>>, vector<56x96xf32>
    %cst_9 = arith.constant dense<0.000000e+00> : vector<2x96xf32>
    %10 = tpu.matmul %8, %9, %cst_9 {dimension_numbers = #tpu.dot_dimension_numbers<[1], [0], [0], [1], [0, 0, 1, 1], [], []>} : vector<2x56xf32>, vector<56x96xf32>, vector<2x96xf32> -> vector<2x96xf32>
    %c0_10 = arith.constant 0 : index
    %c0_11 = arith.constant 0 : index
    %11 = vector.load %arg5[%c0_10, %c0_11] : memref<1x96xf32, #tpu.memory_space<vmem>>, vector<1x96xf32>
    %12 = vector.broadcast %11 : vector<1x96xf32> to vector<2x96xf32>
    %13 = arith.addf %10, %12 : vector<2x96xf32>
    %cst_12 = arith.constant 0.000000e+00 : f32
    %14 = vector.broadcast %cst_12 : f32 to vector<2x96xf32>
    %15 = arith.maximumf %13, %14 : vector<2x96xf32>
    %16 = vector.extract_strided_slice %15 {offsets = [0, 0], sizes = [2, 88], strides = [1, 1]} : vector<2x96xf32> to vector<2x88xf32>
    %17 = vector.extract_strided_slice %15 {offsets = [0, 8], sizes = [2, 88], strides = [1, 1]} : vector<2x96xf32> to vector<2x88xf32>
    %18 = arith.maximumf %16, %17 : vector<2x88xf32>
    %c0_13 = arith.constant 0 : index
    %c0_14 = arith.constant 0 : index
    %19 = vector.load %arg6[%c0_13, %c0_14] : memref<88x32xf32, #tpu.memory_space<vmem>>, vector<88x32xf32>
    %cst_15 = arith.constant dense<0.000000e+00> : vector<2x32xf32>
    %20 = tpu.matmul %18, %19, %cst_15 {dimension_numbers = #tpu.dot_dimension_numbers<[1], [0], [0], [1], [0, 0, 1, 1], [], []>} : vector<2x88xf32>, vector<88x32xf32>, vector<2x32xf32> -> vector<2x32xf32>
    %c0_16 = arith.constant 0 : index
    %c0_17 = arith.constant 0 : index
    %21 = vector.load %arg7[%c0_16, %c0_17] : memref<1x32xf32, #tpu.memory_space<vmem>>, vector<1x32xf32>
    %22 = vector.broadcast %21 : vector<1x32xf32> to vector<2x32xf32>
    %23 = arith.addf %20, %22 : vector<2x32xf32>
    %cst_18 = arith.constant 0.000000e+00 : f32
    %24 = vector.broadcast %cst_18 : f32 to vector<2x32xf32>
    %25 = arith.maximumf %23, %24 : vector<2x32xf32>
    %c0_19 = arith.constant 0 : index
    %c0_20 = arith.constant 0 : index
    %26 = vector.load %arg8[%c0_19, %c0_20] : memref<32x16xf32, #tpu.memory_space<vmem>>, vector<32x16xf32>
    %cst_21 = arith.constant dense<0.000000e+00> : vector<2x16xf32>
    %27 = tpu.matmul %25, %26, %cst_21 {dimension_numbers = #tpu.dot_dimension_numbers<[1], [0], [0], [1], [0, 0, 1, 1], [], []>} : vector<2x32xf32>, vector<32x16xf32>, vector<2x16xf32> -> vector<2x16xf32>
    %c0_22 = arith.constant 0 : index
    %c0_23 = arith.constant 0 : index
    %28 = vector.load %arg9[%c0_22, %c0_23] : memref<1x16xf32, #tpu.memory_space<vmem>>, vector<1x16xf32>
    %29 = vector.broadcast %28 : vector<1x16xf32> to vector<2x16xf32>
    %30 = arith.addf %27, %29 : vector<2x16xf32>
    %c0_24 = arith.constant 0 : index
    %c0_25 = arith.constant 0 : index
    %31 = vector.load %arg10[%c0_24, %c0_25] : memref<16x256xf32, #tpu.memory_space<vmem>>, vector<16x256xf32>
    %cst_26 = arith.constant dense<0.000000e+00> : vector<2x256xf32>
    %32 = tpu.matmul %30, %31, %cst_26 {dimension_numbers = #tpu.dot_dimension_numbers<[1], [0], [0], [1], [0, 0, 1, 1], [], []>} : vector<2x16xf32>, vector<16x256xf32>, vector<2x256xf32> -> vector<2x256xf32>
    %c0_27 = arith.constant 0 : index
    %c0_28 = arith.constant 0 : index
    %33 = vector.load %arg11[%c0_27, %c0_28] : memref<1x256xf32, #tpu.memory_space<vmem>>, vector<1x256xf32>
    %34 = vector.broadcast %33 : vector<1x256xf32> to vector<2x256xf32>
    %35 = arith.addf %32, %34 : vector<2x256xf32>
    %c0_29 = arith.constant 0 : index
    %c0_30 = arith.constant 0 : index
    %c0_31 = arith.constant 0 : index
    %36 = vector.load %arg12[%c0_29, %c0_30, %c0_31] : memref<1x2x256xf32, #tpu.memory_space<vmem>>, vector<1x2x256xf32>
    %37 = vector.shape_cast %36 : vector<1x2x256xf32> to vector<2x256xf32>
    %38 = vector.shape_cast %35 : vector<2x256xf32> to vector<1x2x256xf32>
    tpu.vector_store %arg12[%c0_29, %c0_30, %c0_31], %38 {strides = array<i32>} : memref<1x2x256xf32, #tpu.memory_space<vmem>>, vector<1x2x256xf32>,
    return
  }
  func.func @transform_0(%arg0: i32) -> (i32, i32, i32) {
    %c0_i32 = arith.constant 0 : i32
    %c0_i32_0 = arith.constant 0 : i32
    %c0_i32_1 = arith.constant 0 : i32
    return %arg0, %c0_i32, %c0_i32_0 : i32, i32, i32
  }
  func.func @transform_1(%arg0: i32) -> (i32, i32) {
    %c0_i32 = arith.constant 0 : i32
    %c0_i32_0 = arith.constant 0 : i32
    %c0_i32_1 = arith.constant 0 : i32
    return %c0_i32, %c0_i32_0 : i32, i32
  }
  func.func @transform_2(%arg0: i32) -> (i32, i32) {
    %c0_i32 = arith.constant 0 : i32
    %c0_i32_0 = arith.constant 0 : i32
    %c0_i32_1 = arith.constant 0 : i32
    return %c0_i32, %c0_i32_0 : i32, i32
  }
  func.func @transform_3(%arg0: i32) -> (i32, i32) {
    %c0_i32 = arith.constant 0 : i32
    %c0_i32_0 = arith.constant 0 : i32
    %c0_i32_1 = arith.constant 0 : i32
    return %c0_i32, %c0_i32_0 : i32, i32
  }
  func.func @transform_4(%arg0: i32) -> (i32, i32) {
    %c0_i32 = arith.constant 0 : i32
    %c0_i32_0 = arith.constant 0 : i32
    %c0_i32_1 = arith.constant 0 : i32
    return %c0_i32, %c0_i32_0 : i32, i32
  }
  func.func @transform_5(%arg0: i32) -> (i32, i32) {
    %c0_i32 = arith.constant 0 : i32
    %c0_i32_0 = arith.constant 0 : i32
    %c0_i32_1 = arith.constant 0 : i32
    return %c0_i32, %c0_i32_0 : i32, i32
  }
  func.func @transform_6(%arg0: i32) -> (i32, i32) {
    %c0_i32 = arith.constant 0 : i32
    %c0_i32_0 = arith.constant 0 : i32
    %c0_i32_1 = arith.constant 0 : i32
    return %c0_i32, %c0_i32_0 : i32, i32
  }
  func.func @transform_7(%arg0: i32) -> (i32, i32) {
    %c0_i32 = arith.constant 0 : i32
    %c0_i32_0 = arith.constant 0 : i32
    %c0_i32_1 = arith.constant 0 : i32
    return %c0_i32, %c0_i32_0 : i32, i32
  }
  func.func @transform_8(%arg0: i32) -> (i32, i32) {
    %c0_i32 = arith.constant 0 : i32
    %c0_i32_0 = arith.constant 0 : i32
    %c0_i32_1 = arith.constant 0 : i32
    return %c0_i32, %c0_i32_0 : i32, i32
  }
  func.func @transform_9(%arg0: i32) -> (i32, i32) {
    %c0_i32 = arith.constant 0 : i32
    %c0_i32_0 = arith.constant 0 : i32
    %c0_i32_1 = arith.constant 0 : i32
    return %c0_i32, %c0_i32_0 : i32, i32
  }
  func.func @transform_10(%arg0: i32) -> (i32, i32) {
    %c0_i32 = arith.constant 0 : i32
    %c0_i32_0 = arith.constant 0 : i32
    %c0_i32_1 = arith.constant 0 : i32
    return %c0_i32, %c0_i32_0 : i32, i32
  }
  func.func @transform_11(%arg0: i32) -> (i32, i32, i32) {
    %c0_i32 = arith.constant 0 : i32
    %c0_i32_0 = arith.constant 0 : i32
    %c0_i32_1 = arith.constant 0 : i32
    return %arg0, %c0_i32, %c0_i32_0 : i32, i32, i32
  }
}

</mosaic_0001>

<llo_original>
// kernel: siamese_forward.1
$region0: #{siamese_forward.1}
  #allocation0 [shape = 'u32[]', space=smem, size = 0x4, offset = 0x4, fixed_abs, tag = 'smem constant byte address 0x4 - core index']
  #allocation1 [shape = 'u32[144,128]{1,0:T(1,128)}', space=vmem, size = 0x12000, scoped, tag = 'internal scratch']
  %s0 = inlined_call_operand.vmem [shape: f32[2,2,16], index: 0, kind: input, shape index: {}]
  %s1 = inlined_call_operand.vmem [shape: f32[16,56], index: 1, kind: input, shape index: {}]
  %s2 = inlined_call_operand.vmem [shape: f32[1,56], index: 2, kind: input, shape index: {}]
  %s3 = inlined_call_operand.vmem [shape: f32[56,96], index: 3, kind: input, shape index: {}]
  %s4 = inlined_call_operand.vmem [shape: f32[1,96], index: 4, kind: input, shape index: {}]
  %s5 = inlined_call_operand.vmem [shape: f32[88,32], index: 5, kind: input, shape index: {}]
  %s6 = inlined_call_operand.vmem [shape: f32[1,32], index: 6, kind: input, shape index: {}]
  %s7 = inlined_call_operand.vmem [shape: f32[32,16], index: 7, kind: input, shape index: {}]
  %s8 = inlined_call_operand.vmem [shape: f32[1,16], index: 8, kind: input, shape index: {}]
  %s9 = inlined_call_operand.vmem [shape: f32[16,256], index: 9, kind: input, shape index: {}]
  %s10 = inlined_call_operand.vmem [shape: f32[1,256], index: 10, kind: input, shape index: {}]
  %s11 = inlined_call_operand.vmem [shape: f32[2,2,256], index: 11, kind: output, shape index: {}]
  %s12 = sld [smem:[#allocation0]]
  $region77: #{siamese_forward.1} parent=0
    _
  %s14 = ssub.s32 1, %s12
  %s15 = scalar_select 0, %s14, %s12
  loop: start=0, step=1, limit=4
  $region2: #{siamese_forward.1} parent=0 // loop_pre_header
    _
  $region3: #{siamese_forward.1} parent=0 // loop_header
    %s17 = sphi 0, %s21
    %p18 = scmp.ge.s32.totalorder %s17, 4
    %s27 = sphi 0, %s29
    %s30 = sphi 0, %s27
    %s31 = sphi 0, %s30
    %s47 = sphi 0, %s31
    %s51 = sphi 0, %s51
    %s53 = sphi 0, %s51
    %s54 = sphi 0, %s53
    %s68 = sphi 0, %s54
    %s72 = sphi 0, %s72
    %s74 = sphi 0, %s72
    %s75 = sphi 0, %s74
    %s89 = sphi 0, %s75
    %s93 = sphi 0, %s93
    %s95 = sphi 0, %s93
    %s96 = sphi 0, %s95
    %s110 = sphi 0, %s96
    %s114 = sphi 0, %s114
    %s116 = sphi 0, %s114
    %s117 = sphi 0, %s116
    %s131 = sphi 0, %s117
    %s135 = sphi 0, %s135
    %s137 = sphi 0, %s135
    %s138 = sphi 0, %s137
    %s152 = sphi 0, %s138
    %s156 = sphi 0, %s156
    %s158 = sphi 0, %s156
    %s159 = sphi 0, %s158
    %s173 = sphi 0, %s159
    %s177 = sphi 0, %s177
    %s179 = sphi 0, %s177
    %s180 = sphi 0, %s179
    %s194 = sphi 0, %s180
    %s198 = sphi 0, %s198
    %s200 = sphi 0, %s198
    %s201 = sphi 0, %s200
    %s215 = sphi 0, %s201
    %s219 = sphi 0, %s219
    %s221 = sphi 0, %s219
    %s222 = sphi 0, %s221
    %s236 = sphi 0, %s222
    %s240 = sphi 0, %s240
    %s242 = sphi 0, %s240
    %s243 = sphi 0, %s242
    %s257 = sphi 0, %s243
    %s263 = sphi 0, %s265
    %s266 = sphi 0, %s263
    %s267 = sphi 0, %s266
    %s283 = sphi 0, %s267
  $region4: #{siamese_forward.1} parent=0 // loop_header_branch
    %20 = sbr.rel (%p18) target = $region8
  $region5: #{siamese_forward.1} parent=0 // loop_body
    %s22 = ssub.s32 %s17, 1
    %s23 = ssub.s32 %s17, 2
    %s24 = sadd.s32 %s17, 1
    %s25 = ssub.s32 %s17, %s24
    %p26 = scmp.eq.s32.totalorder %s25, 0
    %s28 = sadd.s32 %s27, 1
    %s29 = scalar_select %p26, %s27, %s28
    %p32 = pneg %p26
    %p33 = scmp.eq.s32.totalorder %s17, 1
    %p34 = por %p32, %p33
    %p35 = scmp.ne.s32.totalorder %s27, %s30
    %p36 = scmp.eq.s32.totalorder %s17, 0
    %p37 = por %p35, %p36
    %p38 = scmp.ne.s32.totalorder %s27, %s30
    %p39 = scmp.eq.s32.totalorder %s22, 1
    %p40 = por %p38, %p39
    %p41 = scmp.ne.s32.totalorder %s30, %s31
    %p42 = scmp.eq.s32.totalorder %s22, 0
    %p43 = por %p41, %p42
    %p44 = scmp.ne.s32.totalorder %s30, %s31
    %p45 = scmp.eq.s32.totalorder %s23, 1
    %p46 = por %p44, %p45
    %p48 = scmp.ne.s32.totalorder %s31, %s47
    %p49 = scmp.eq.s32.totalorder %s23, 0
    %p50 = por %p48, %p49
    %s52 = sadd.s32 %s51, 1
    %p55 = scmp.eq.s32.totalorder %s17, 1
    %p56 = scmp.ne.s32.totalorder %s51, %s53
    %p57 = scmp.eq.s32.totalorder %s17, 0
    %p58 = por %p56, %p57
    %p59 = scmp.ne.s32.totalorder %s51, %s53
    %p60 = scmp.eq.s32.totalorder %s22, 1
    %p61 = por %p59, %p60
    %p62 = scmp.ne.s32.totalorder %s53, %s54
    %p63 = scmp.eq.s32.totalorder %s22, 0
    %p64 = por %p62, %p63
    %p65 = scmp.ne.s32.totalorder %s53, %s54
    %p66 = scmp.eq.s32.totalorder %s23, 1
    %p67 = por %p65, %p66
    %p69 = scmp.ne.s32.totalorder %s54, %s68
    %p70 = scmp.eq.s32.totalorder %s23, 0
    %p71 = por %p69, %p70
    %s73 = sadd.s32 %s72, 1
    %p76 = scmp.eq.s32.totalorder %s17, 1
    %p77 = scmp.ne.s32.totalorder %s72, %s74
    %p78 = scmp.eq.s32.totalorder %s17, 0
    %p79 = por %p77, %p78
    %p80 = scmp.ne.s32.totalorder %s72, %s74
    %p81 = scmp.eq.s32.totalorder %s22, 1
    %p82 = por %p80, %p81
    %p83 = scmp.ne.s32.totalorder %s74, %s75
    %p84 = scmp.eq.s32.totalorder %s22, 0
    %p85 = por %p83, %p84
    %p86 = scmp.ne.s32.totalorder %s74, %s75
    %p87 = scmp.eq.s32.totalorder %s23, 1
    %p88 = por %p86, %p87
    %p90 = scmp.ne.s32.totalorder %s75, %s89
    %p91 = scmp.eq.s32.totalorder %s23, 0
    %p92 = por %p90, %p91
    %s94 = sadd.s32 %s93, 1
    %p97 = scmp.eq.s32.totalorder %s17, 1
    %p98 = scmp.ne.s32.totalorder %s93, %s95
    %p99 = scmp.eq.s32.totalorder %s17, 0
    %p100 = por %p98, %p99
    %p101 = scmp.ne.s32.totalorder %s93, %s95
    %p102 = scmp.eq.s32.totalorder %s22, 1
    %p103 = por %p101, %p102
    %p104 = scmp.ne.s32.totalorder %s95, %s96
    %p105 = scmp.eq.s32.totalorder %s22, 0
    %p106 = por %p104, %p105
    %p107 = scmp.ne.s32.totalorder %s95, %s96
    %p108 = scmp.eq.s32.totalorder %s23, 1
    %p109 = por %p107, %p108
    %p111 = scmp.ne.s32.totalorder %s96, %s110
    %p112 = scmp.eq.s32.totalorder %s23, 0
    %p113 = por %p111, %p112
    %s115 = sadd.s32 %s114, 1
    %p118 = scmp.eq.s32.totalorder %s17, 1
    %p119 = scmp.ne.s32.totalorder %s114, %s116
    %p120 = scmp.eq.s32.totalorder %s17, 0
    %p121 = por %p119, %p120
    %p122 = scmp.ne.s32.totalorder %s114, %s116
    %p123 = scmp.eq.s32.totalorder %s22, 1
    %p124 = por %p122, %p123
    %p125 = scmp.ne.s32.totalorder %s116, %s117
    %p126 = scmp.eq.s32.totalorder %s22, 0
    %p127 = por %p125, %p126
    %p128 = scmp.ne.s32.totalorder %s116, %s117
    %p129 = scmp.eq.s32.totalorder %s23, 1
    %p130 = por %p128, %p129
    %p132 = scmp.ne.s32.totalorder %s117, %s131
    %p133 = scmp.eq.s32.totalorder %s23, 0
    %p134 = por %p132, %p133
    %s136 = sadd.s32 %s135, 1
    %p139 = scmp.eq.s32.totalorder %s17, 1
    %p140 = scmp.ne.s32.totalorder %s135, %s137
    %p141 = scmp.eq.s32.totalorder %s17, 0
    %p142 = por %p140, %p141
    %p143 = scmp.ne.s32.totalorder %s135, %s137
    %p144 = scmp.eq.s32.totalorder %s22, 1
    %p145 = por %p143, %p144
    %p146 = scmp.ne.s32.totalorder %s137, %s138
    %p147 = scmp.eq.s32.totalorder %s22, 0
    %p148 = por %p146, %p147
    %p149 = scmp.ne.s32.totalorder %s137, %s138
    %p150 = scmp.eq.s32.totalorder %s23, 1
    %p151 = por %p149, %p150
    %p153 = scmp.ne.s32.totalorder %s138, %s152
    %p154 = scmp.eq.s32.totalorder %s23, 0
    %p155 = por %p153, %p154
    %s157 = sadd.s32 %s156, 1
    %p160 = scmp.eq.s32.totalorder %s17, 1
    %p161 = scmp.ne.s32.totalorder %s156, %s158
    %p162 = scmp.eq.s32.totalorder %s17, 0
    %p163 = por %p161, %p162
    %p164 = scmp.ne.s32.totalorder %s156, %s158
    %p165 = scmp.eq.s32.totalorder %s22, 1
    %p166 = por %p164, %p165
    %p167 = scmp.ne.s32.totalorder %s158, %s159
    %p168 = scmp.eq.s32.totalorder %s22, 0
    %p169 = por %p167, %p168
    %p170 = scmp.ne.s32.totalorder %s158, %s159
    %p171 = scmp.eq.s32.totalorder %s23, 1
    %p172 = por %p170, %p171
    %p174 = scmp.ne.s32.totalorder %s159, %s173
    %p175 = scmp.eq.s32.totalorder %s23, 0
    %p176 = por %p174, %p175
    %s178 = sadd.s32 %s177, 1
    %p181 = scmp.eq.s32.totalorder %s17, 1
    %p182 = scmp.ne.s32.totalorder %s177, %s179
    %p183 = scmp.eq.s32.totalorder %s17, 0
    %p184 = por %p182, %p183
    %p185 = scmp.ne.s32.totalorder %s177, %s179
    %p186 = scmp.eq.s32.totalorder %s22, 1
    %p187 = por %p185, %p186
    %p188 = scmp.ne.s32.totalorder %s179, %s180
    %p189 = scmp.eq.s32.totalorder %s22, 0
    %p190 = por %p188, %p189
    %p191 = scmp.ne.s32.totalorder %s179, %s180
    %p192 = scmp.eq.s32.totalorder %s23, 1
    %p193 = por %p191, %p192
    %p195 = scmp.ne.s32.totalorder %s180, %s194
    %p196 = scmp.eq.s32.totalorder %s23, 0
    %p197 = por %p195, %p196
    %s199 = sadd.s32 %s198, 1
    %p202 = scmp.eq.s32.totalorder %s17, 1
    %p203 = scmp.ne.s32.totalorder %s198, %s200
    %p204 = scmp.eq.s32.totalorder %s17, 0
    %p205 = por %p203, %p204
    %p206 = scmp.ne.s32.totalorder %s198, %s200
    %p207 = scmp.eq.s32.totalorder %s22, 1
    %p208 = por %p206, %p207
    %p209 = scmp.ne.s32.totalorder %s200, %s201
    %p210 = scmp.eq.s32.totalorder %s22, 0
    %p211 = por %p209, %p210
    %p212 = scmp.ne.s32.totalorder %s200, %s201
    %p213 = scmp.eq.s32.totalorder %s23, 1
    %p214 = por %p212, %p213
    %p216 = scmp.ne.s32.totalorder %s201, %s215
    %p217 = scmp.eq.s32.totalorder %s23, 0
    %p218 = por %p216, %p217
    %s220 = sadd.s32 %s219, 1
    %p223 = scmp.eq.s32.totalorder %s17, 1
    %p224 = scmp.ne.s32.totalorder %s219, %s221
    %p225 = scmp.eq.s32.totalorder %s17, 0
    %p226 = por %p224, %p225
    %p227 = scmp.ne.s32.totalorder %s219, %s221
    %p228 = scmp.eq.s32.totalorder %s22, 1
    %p229 = por %p227, %p228
    %p230 = scmp.ne.s32.totalorder %s221, %s222
    %p231 = scmp.eq.s32.totalorder %s22, 0
    %p232 = por %p230, %p231
    %p233 = scmp.ne.s32.totalorder %s221, %s222
    %p234 = scmp.eq.s32.totalorder %s23, 1
    %p235 = por %p233, %p234
    %p237 = scmp.ne.s32.totalorder %s222, %s236
    %p238 = scmp.eq.s32.totalorder %s23, 0
    %p239 = por %p237, %p238
    %s241 = sadd.s32 %s240, 1
    %p244 = scmp.eq.s32.totalorder %s17, 1
    %p245 = scmp.ne.s32.totalorder %s240, %s242
    %p246 = scmp.eq.s32.totalorder %s17, 0
    %p247 = por %p245, %p246
    %p248 = scmp.ne.s32.totalorder %s240, %s242
    %p249 = scmp.eq.s32.totalorder %s22, 1
    %p250 = por %p248, %p249
    %p251 = scmp.ne.s32.totalorder %s242, %s243
    %p252 = scmp.eq.s32.totalorder %s22, 0
    %p253 = por %p251, %p252
    %p254 = scmp.ne.s32.totalorder %s242, %s243
    %p255 = scmp.eq.s32.totalorder %s23, 1
    %p256 = por %p254, %p255
    %p258 = scmp.ne.s32.totalorder %s243, %s257
    %p259 = scmp.eq.s32.totalorder %s23, 0
    %p260 = por %p258, %p259
    %s261 = ssub.s32 %s17, %s24
    %p262 = scmp.eq.s32.totalorder %s261, 0
    %s264 = sadd.s32 %s263, 1
    %s265 = scalar_select %p262, %s263, %s264
    %p268 = pneg %p262
    %p269 = scmp.eq.s32.totalorder %s17, 1
    %p270 = por %p268, %p269
    %p271 = scmp.ne.s32.totalorder %s263, %s266
    %p272 = scmp.eq.s32.totalorder %s17, 0
    %p273 = por %p271, %p272
    %p274 = scmp.ne.s32.totalorder %s263, %s266
    %p275 = scmp.eq.s32.totalorder %s22, 1
    %p276 = por %p274, %p275
    %p277 = scmp.ne.s32.totalorder %s266, %s267
    %p278 = scmp.eq.s32.totalorder %s22, 0
    %p279 = por %p277, %p278
    %p280 = scmp.ne.s32.totalorder %s266, %s267
    %p281 = scmp.eq.s32.totalorder %s23, 1
    %p282 = por %p280, %p281
    %p284 = scmp.ne.s32.totalorder %s267, %s283
    %p285 = scmp.eq.s32.totalorder %s23, 0
    %p286 = por %p284, %p285
    %p287 = scmp.le.s32.totalorder 1, %s17
    %p288 = scmp.lt.s32.totalorder %s17, 3
    %p289 = pnand %p287, %p288
    %p290 = pneg %p289
    // Predicated region
    $region9: #{siamese_forward.1} parent=5 // pred_check
      _
    $region10: #{siamese_forward.1} parent=5 // pred_check_branch
      %292 = sbr.rel (%p289) target = $region12
    $region11: #{siamese_forward.1} parent=5 // pred_region
      %s293 = ssub.s32 %s17, 1
      // Predicated region
      $region13: #{siamese_forward.1} parent=11 // pred_check
        %p294 = pneg %p64
      $region14: #{siamese_forward.1} parent=11 // pred_check_branch
        %296 = sbr.rel (%p294) target = $region16
      $region15: #{siamese_forward.1} parent=11 // pred_region
        _
      $region16: #{siamese_forward.1} parent=11 // pred_fallthru
        _
      // Predicated region
      $region17: #{siamese_forward.1} parent=11 // pred_check
        %p297 = pneg %p85
      $region18: #{siamese_forward.1} parent=11 // pred_check_branch
        %299 = sbr.rel (%p297) target = $region20
      $region19: #{siamese_forward.1} parent=11 // pred_region
        _
      $region20: #{siamese_forward.1} parent=11 // pred_fallthru
        _
      // Predicated region
      $region21: #{siamese_forward.1} parent=11 // pred_check
        %p300 = pneg %p106
      $region22: #{siamese_forward.1} parent=11 // pred_check_branch
        %302 = sbr.rel (%p300) target = $region24
      $region23: #{siamese_forward.1} parent=11 // pred_region
        _
      $region24: #{siamese_forward.1} parent=11 // pred_fallthru
        _
      // Predicated region
      $region25: #{siamese_forward.1} parent=11 // pred_check
        %p303 = pneg %p127
      $region26: #{siamese_forward.1} parent=11 // pred_check_branch
        %305 = sbr.rel (%p303) target = $region28
      $region27: #{siamese_forward.1} parent=11 // pred_region
        _
      $region28: #{siamese_forward.1} parent=11 // pred_fallthru
        _
      // Predicated region
      $region29: #{siamese_forward.1} parent=11 // pred_check
        %p306 = pneg %p148
      $region30: #{siamese_forward.1} parent=11 // pred_check_branch
        %308 = sbr.rel (%p306) target = $region32
      $region31: #{siamese_forward.1} parent=11 // pred_region
        _
      $region32: #{siamese_forward.1} parent=11 // pred_fallthru
        _
      // Predicated region
      $region33: #{siamese_forward.1} parent=11 // pred_check
        %p309 = pneg %p169
      $region34: #{siamese_forward.1} parent=11 // pred_check_branch
        %311 = sbr.rel (%p309) target = $region36
      $region35: #{siamese_forward.1} parent=11 // pred_region
        _
      $region36: #{siamese_forward.1} parent=11 // pred_fallthru
        _
      // Predicated region
      $region37: #{siamese_forward.1} parent=11 // pred_check
        %p312 = pneg %p190
      $region38: #{siamese_forward.1} parent=11 // pred_check_branch
        %314 = sbr.rel (%p312) target = $region40
      $region39: #{siamese_forward.1} parent=11 // pred_region
        _
      $region40: #{siamese_forward.1} parent=11 // pred_fallthru
        _
      // Predicated region
      $region41: #{siamese_forward.1} parent=11 // pred_check
        %p315 = pneg %p211
      $region42: #{siamese_forward.1} parent=11 // pred_check_branch
        %317 = sbr.rel (%p315) target = $region44
      $region43: #{siamese_forward.1} parent=11 // pred_region
        _
      $region44: #{siamese_forward.1} parent=11 // pred_fallthru
        _
      // Predicated region
      $region45: #{siamese_forward.1} parent=11 // pred_check
        %p318 = pneg %p232
      $region46: #{siamese_forward.1} parent=11 // pred_check_branch
        %320 = sbr.rel (%p318) target = $region48
      $region47: #{siamese_forward.1} parent=11 // pred_region
        _
      $region48: #{siamese_forward.1} parent=11 // pred_fallthru
        _
      // Predicated region
      $region49: #{siamese_forward.1} parent=11 // pred_check
        %p321 = pneg %p253
      $region50: #{siamese_forward.1} parent=11 // pred_check_branch
        %323 = sbr.rel (%p321) target = $region52
      $region51: #{siamese_forward.1} parent=11 // pred_region
        _
      $region52: #{siamese_forward.1} parent=11 // pred_fallthru
        _
    $region12: #{siamese_forward.1} parent=5 // pred_fallthru
      _
    %p324 = scmp.lt.s32.totalorder %s17, 2
    // Predicated region
    $region53: #{siamese_forward.1} parent=5 // pred_check
      %p325 = pneg %p324
    $region54: #{siamese_forward.1} parent=5 // pred_check_branch
      %327 = sbr.rel (%p325) target = $region56
    $region55: #{siamese_forward.1} parent=5 // pred_region
      // Predicated region
      $region57: #{siamese_forward.1} parent=55 // pred_check
        %p328 = pneg %p37
      $region58: #{siamese_forward.1} parent=55 // pred_check_branch
        %330 = sbr.rel (%p328) target = $region60
      $region59: #{siamese_forward.1} parent=55 // pred_region
        %p331 = scmp.lt.s32.totalorder %s17, 1
        %s332 = scalar_select %p331, %s17, 1
        %s333 = smul.addr %s332, 2
        %s334 = scalar_lea.vmem %s0, %s333
      $region60: #{siamese_forward.1} parent=55 // pred_fallthru
        _
    $region56: #{siamese_forward.1} parent=5 // pred_fallthru
      _
    %p335 = scmp.le.s32.totalorder 1, %s17
    %p336 = scmp.lt.s32.totalorder %s17, 3
    %p337 = pnand %p335, %p336
    %p338 = pneg %p337
    // Predicated region
    $region61: #{siamese_forward.1} parent=5 // pred_check
      _
    $region62: #{siamese_forward.1} parent=5 // pred_check_branch
      %340 = sbr.rel (%p337) target = $region64
    $region63: #{siamese_forward.1} parent=5 // pred_region
      %s341 = ssub.s32 %s17, 1
      %p342 = scmp.lt.s32.totalorder %s22, 1
      %s343 = scalar_select %p342, %s22, 1
      %s344 = smul.addr %s343, 2
      %s345 = scalar_lea.vmem %s0, %s344
      %p346 = pneg %p43
      %p347 = pneg %p40
      %p348 = pneg %p64
      %p349 = pneg %p61
      %p350 = pneg %p85
      %p351 = pneg %p82
      %p352 = pneg %p106
      %p353 = pneg %p103
      %p354 = pneg %p127
      %p355 = pneg %p124
      %p356 = pneg %p148
      %p357 = pneg %p145
      %p358 = pneg %p169
      %p359 = pneg %p166
      %p360 = pneg %p190
      %p361 = pneg %p187
      %p362 = pneg %p211
      %p363 = pneg %p208
      %p364 = pneg %p232
      %p365 = pneg %p229
      %p366 = pneg %p253
      %p367 = pneg %p250
      %p368 = pneg %p279
      %p369 = pneg %p276
      %p370 = scmp.lt.s32.totalorder %s22, 1
      %s371 = scalar_select %p370, %s22, 1
      %s372 = smul.addr %s371, 2
      %s373 = smul.addr %s372, 2
      %s374 = scalar_lea.vmem %s11, %s373
      %p375 = scmp.lt.s32.totalorder %s22, 1
      %s376 = scalar_select %p375, %s22, 1
      %s377 = smul.addr %s376, 2
      %s378 = scalar_lea.vmem %s0, %s377
      %p379 = scmp.lt.s32.totalorder %s22, 1
      %s380 = scalar_select %p379, %s22, 1
      %s381 = smul.addr %s380, 2
      %s382 = smul.addr %s381, 2
      %s383 = scalar_lea.vmem %s11, %s382
      %v384 = vld [vmem:[%s378] sm:$0x3]
      %v385 = vld [vmem:[%s1] sm:$0xff]
      %v386 = vld [vmem:[%s1 + $0x8] sm:$0xff]
      %v387 = vld [vmem:[%s2] sm:$0x1]
      %v389 = vlaneseq
      %v390 = vshrl.u32 %v389, 7
      %v391 = vsub.s32 0, %v390
      %v392 = vrot.slane %v387, %v391
      %vm394 = vcmask 130048
      %v396 = vsel %vm394, %v384, 0
      %398 = vmatprep.subr.mxu0 0.0
      %399 = vmatpush1.msra.mxu0 %v385
      %400 = vmatprep.subr.mxu0 0.0
      %401 = vmatpush1.msra.mxu0 %v386
      %402 = vmatprep.subr.mxu0 0.0
      %403 = vmatpush1.msra.mxu0 0.0
      %404 = vmatprep.subr.mxu0 0.0
      %405 = vmatpush1.msra.mxu0 0.0
      %406 = vmatprep.subr.mxu0 0.0
      %407 = vmatpush1.msra.mxu0 0.0
      %408 = vmatprep.subr.mxu0 0.0
      %409 = vmatpush1.msra.mxu0 0.0
      %410 = vmatprep.subr.mxu0 0.0
      %411 = vmatpush1.msra.mxu0 0.0
      %412 = vmatprep.subr.mxu0 0.0
      %413 = vmatpush1.msra.mxu0 0.0
      %414 = vmatprep.subr.mxu0 0.0
      %415 = vmatpush1.msra.mxu0 0.0
      %416 = vmatprep.subr.mxu0 0.0
      %417 = vmatpush1.msra.mxu0 0.0
      %418 = vmatprep.subr.mxu0 0.0
      %419 = vmatpush1.msra.mxu0 0.0
      %420 = vmatprep.subr.mxu0 0.0
      %421 = vmatpush1.msra.mxu0 0.0
      %422 = vmatprep.subr.mxu0 0.0
      %423 = vmatpush1.msra.mxu0 0.0
      %424 = vmatprep.subr.mxu0 0.0
      %425 = vmatpush1.msra.mxu0 0.0
      %426 = vmatprep.subr.mxu0 0.0
      %427 = vmatpush1.msra.mxu0 0.0
      %428 = vmatprep.subr.mxu0 0.0
      %429 = vmatpush1.msra.mxu0 0.0
      %430 = vmatprep.subr.mxu0 0.0
      %431 = vmatpush1.msra.mxu0 0.0
      %432 = vmatprep.subr.mxu0 0.0
      %433 = vmatpush1.msra.mxu0 0.0
      %434 = vmatprep.subr.mxu0 0.0
      %435 = vmatpush1.msra.mxu0 0.0
      %436 = vmatprep.subr.mxu0 0.0
      %437 = vmatpush1.msra.mxu0 0.0
      %438 = vmatprep.subr.mxu0 0.0
      %439 = vmatpush1.msra.mxu0 0.0
      %440 = vmatprep.subr.mxu0 0.0
      %441 = vmatpush1.msra.mxu0 0.0
      %442 = vmatprep.subr.mxu0 0.0
      %443 = vmatpush1.msra.mxu0 0.0
      %444 = vmatprep.subr.mxu0 0.0
      %445 = vmatpush1.msra.mxu0 0.0
      %446 = vmatprep.subr.mxu0 0.0
      %447 = vmatpush1.msra.mxu0 0.0
      %448 = vmatprep.subr.mxu0 0.0
      %449 = vmatpush1.msra.mxu0 0.0
      %450 = vmatprep.subr.mxu0 0.0
      %451 = vmatpush1.msra.mxu0 0.0
      %452 = vmatprep.subr.mxu0 0.0
      %453 = vmatpush1.msra.mxu0 0.0
      %454 = vmatprep.subr.mxu0 0.0
      %455 = vmatpush1.msra.mxu0 0.0
      %456 = vmatprep.subr.mxu0 0.0
      %457 = vmatpush1.msra.mxu0 0.0
      %458 = vmatprep.subr.mxu0 0.0
      %459 = vmatpush1.msra.mxu0 0.0
      %460 = vmatprep.subr.mxu0 0.0
      %461 = vmatpush1.msra.mxu0 0.0
      %462 = vmatprep.mubr.f32.mxu0 0.0
      %463 = vmatmul.mubr.f32.gmra.mrb[0].mxu0 %v396
      %v464 = vpop.f32.mrb[0].mxu0
      %v465 = vadd.f32 %v392, %v464
      %v466 = vpop.f32.mrb[0].mxu0
      %467 = vdwg.mxu0
      %v468 = vmax.f32 %v465, 0.0
      %v469 = vld [vmem:[%s3] sm:$0xff]
      %v470 = vld [vmem:[%s3 + $0x8] sm:$0xff]
      %v471 = vld [vmem:[%s3 + $0x10] sm:$0xff]
      %v472 = vld [vmem:[%s3 + $0x18] sm:$0xff]
      %v473 = vld [vmem:[%s3 + $0x20] sm:$0xff]
      %v474 = vld [vmem:[%s3 + $0x28] sm:$0xff]
      %v475 = vld [vmem:[%s3 + $0x30] sm:$0xff]
      %v476 = vld [vmem:[%s4] sm:$0x1]
      %v478 = vlaneseq
      %v479 = vshrl.u32 %v478, 7
      %v480 = vsub.s32 0, %v479
      %v481 = vrot.slane %v476, %v480
      %vm483 = vcmask 457728
      %v485 = vsel %vm483, %v468, 0
      %487 = vmatprep.subr.mxu0 0.0
      %488 = vmatpush1.msra.mxu0 %v469
      %489 = vmatprep.subr.mxu0 0.0
      %490 = vmatpush1.msra.mxu0 %v470
      %491 = vmatprep.subr.mxu0 0.0
      %492 = vmatpush1.msra.mxu0 %v471
      %493 = vmatprep.subr.mxu0 0.0
      %494 = vmatpush1.msra.mxu0 %v472
      %495 = vmatprep.subr.mxu0 0.0
      %496 = vmatpush1.msra.mxu0 %v473
      %497 = vmatprep.subr.mxu0 0.0
      %498 = vmatpush1.msra.mxu0 %v474
      %499 = vmatprep.subr.mxu0 0.0
      %500 = vmatpush1.msra.mxu0 %v475
      %501 = vmatprep.subr.mxu0 0.0
      %502 = vmatpush1.msra.mxu0 0.0
      %503 = vmatprep.subr.mxu0 0.0
      %504 = vmatpush1.msra.mxu0 0.0
      %505 = vmatprep.subr.mxu0 0.0
      %506 = vmatpush1.msra.mxu0 0.0
      %507 = vmatprep.subr.mxu0 0.0
      %508 = vmatpush1.msra.mxu0 0.0
      %509 = vmatprep.subr.mxu0 0.0
      %510 = vmatpush1.msra.mxu0 0.0
      %511 = vmatprep.subr.mxu0 0.0
      %512 = vmatpush1.msra.mxu0 0.0
      %513 = vmatprep.subr.mxu0 0.0
      %514 = vmatpush1.msra.mxu0 0.0
      %515 = vmatprep.subr.mxu0 0.0
      %516 = vmatpush1.msra.mxu0 0.0
      %517 = vmatprep.subr.mxu0 0.0
      %518 = vmatpush1.msra.mxu0 0.0
      %519 = vmatprep.subr.mxu0 0.0
      %520 = vmatpush1.msra.mxu0 0.0
      %521 = vmatprep.subr.mxu0 0.0
      %522 = vmatpush1.msra.mxu0 0.0
      %523 = vmatprep.subr.mxu0 0.0
      %524 = vmatpush1.msra.mxu0 0.0
      %525 = vmatprep.subr.mxu0 0.0
      %526 = vmatpush1.msra.mxu0 0.0
      %527 = vmatprep.subr.mxu0 0.0
      %528 = vmatpush1.msra.mxu0 0.0
      %529 = vmatprep.subr.mxu0 0.0
      %530 = vmatpush1.msra.mxu0 0.0
      %531 = vmatprep.subr.mxu0 0.0
      %532 = vmatpush1.msra.mxu0 0.0
      %533 = vmatprep.subr.mxu0 0.0
      %534 = vmatpush1.msra.mxu0 0.0
      %535 = vmatprep.subr.mxu0 0.0
      %536 = vmatpush1.msra.mxu0 0.0
      %537 = vmatprep.subr.mxu0 0.0
      %538 = vmatpush1.msra.mxu0 0.0
      %539 = vmatprep.subr.mxu0 0.0
      %540 = vmatpush1.msra.mxu0 0.0
      %541 = vmatprep.subr.mxu0 0.0
      %542 = vmatpush1.msra.mxu0 0.0
      %543 = vmatprep.subr.mxu0 0.0
      %544 = vmatpush1.msra.mxu0 0.0
      %545 = vmatprep.subr.mxu0 0.0
      %546 = vmatpush1.msra.mxu0 0.0
      %547 = vmatprep.subr.mxu0 0.0
      %548 = vmatpush1.msra.mxu0 0.0
      %549 = vmatprep.subr.mxu0 0.0
      %550 = vmatpush1.msra.mxu0 0.0
      %551 = vmatprep.mubr.f32.mxu0 0.0
      %552 = vmatmul.mubr.f32.gmra.mrb[0].mxu0 %v485
      %v553 = vpop.f32.mrb[0].mxu0
      %v554 = vadd.f32 %v481, %v553
      %v555 = vpop.f32.mrb[0].mxu0
      %556 = vdwg.mxu0
      %v557 = vmax.f32 %v554, 0.0
      %559 = vrot.lane.b32.xlu0 %v557, 120
      %v560 = vpop.permute.xlu0 %559
      %v562 = vmax.f32 %v557, %v560
      %v563 = vld [vmem:[%s5] sm:$0xff]
      %v564 = vld [vmem:[%s5 + $0x8] sm:$0xff]
      %v565 = vld [vmem:[%s5 + $0x10] sm:$0xff]
      %v566 = vld [vmem:[%s5 + $0x18] sm:$0xff]
      %v567 = vld [vmem:[%s5 + $0x20] sm:$0xff]
      %v568 = vld [vmem:[%s5 + $0x28] sm:$0xff]
      %v569 = vld [vmem:[%s5 + $0x30] sm:$0xff]
      %v570 = vld [vmem:[%s5 + $0x38] sm:$0xff]
      %v571 = vld [vmem:[%s5 + $0x40] sm:$0xff]
      %v572 = vld [vmem:[%s5 + $0x48] sm:$0xff]
      %v573 = vld [vmem:[%s5 + $0x50] sm:$0xff]
      %v574 = vld [vmem:[%s6] sm:$0x1]
      %v576 = vlaneseq
      %v577 = vshrl.u32 %v576, 7
      %v578 = vsub.s32 0, %v577
      %v579 = vrot.slane %v574, %v578
      %vm581 = vcmask 719872
      %v583 = vsel %vm581, %v562, 0
      %585 = vmatprep.subr.mxu0 0.0
      %586 = vmatpush1.msra.mxu0 %v563
      %587 = vmatprep.subr.mxu0 0.0
      %588 = vmatpush1.msra.mxu0 %v564
      %589 = vmatprep.subr.mxu0 0.0
      %590 = vmatpush1.msra.mxu0 %v565
      %591 = vmatprep.subr.mxu0 0.0
      %592 = vmatpush1.msra.mxu0 %v566
      %593 = vmatprep.subr.mxu0 0.0
      %594 = vmatpush1.msra.mxu0 %v567
      %595 = vmatprep.subr.mxu0 0.0
      %596 = vmatpush1.msra.mxu0 %v568
      %597 = vmatprep.subr.mxu0 0.0
      %598 = vmatpush1.msra.mxu0 %v569
      %599 = vmatprep.subr.mxu0 0.0
      %600 = vmatpush1.msra.mxu0 %v570
      %601 = vmatprep.subr.mxu0 0.0
      %602 = vmatpush1.msra.mxu0 %v571
      %603 = vmatprep.subr.mxu0 0.0
      %604 = vmatpush1.msra.mxu0 %v572
      %605 = vmatprep.subr.mxu0 0.0
      %606 = vmatpush1.msra.mxu0 %v573
      %607 = vmatprep.subr.mxu0 0.0
      %608 = vmatpush1.msra.mxu0 0.0
      %609 = vmatprep.subr.mxu0 0.0
      %610 = vmatpush1.msra.mxu0 0.0
      %611 = vmatprep.subr.mxu0 0.0
      %612 = vmatpush1.msra.mxu0 0.0
      %613 = vmatprep.subr.mxu0 0.0
      %614 = vmatpush1.msra.mxu0 0.0
      %615 = vmatprep.subr.mxu0 0.0
      %616 = vmatpush1.msra.mxu0 0.0
      %617 = vmatprep.subr.mxu0 0.0
      %618 = vmatpush1.msra.mxu0 0.0
      %619 = vmatprep.subr.mxu0 0.0
      %620 = vmatpush1.msra.mxu0 0.0
      %621 = vmatprep.subr.mxu0 0.0
      %622 = vmatpush1.msra.mxu0 0.0
      %623 = vmatprep.subr.mxu0 0.0
      %624 = vmatpush1.msra.mxu0 0.0
      %625 = vmatprep.subr.mxu0 0.0
      %626 = vmatpush1.msra.mxu0 0.0
      %627 = vmatprep.subr.mxu0 0.0
      %628 = vmatpush1.msra.mxu0 0.0
      %629 = vmatprep.subr.mxu0 0.0
      %630 = vmatpush1.msra.mxu0 0.0
      %631 = vmatprep.subr.mxu0 0.0
      %632 = vmatpush1.msra.mxu0 0.0
      %633 = vmatprep.subr.mxu0 0.0
      %634 = vmatpush1.msra.mxu0 0.0
      %635 = vmatprep.subr.mxu0 0.0
      %636 = vmatpush1.msra.mxu0 0.0
      %637 = vmatprep.subr.mxu0 0.0
      %638 = vmatpush1.msra.mxu0 0.0
      %639 = vmatprep.subr.mxu0 0.0
      %640 = vmatpush1.msra.mxu0 0.0
      %641 = vmatprep.subr.mxu0 0.0
      %642 = vmatpush1.msra.mxu0 0.0
      %643 = vmatprep.subr.mxu0 0.0
      %644 = vmatpush1.msra.mxu0 0.0
      %645 = vmatprep.subr.mxu0 0.0
      %646 = vmatpush1.msra.mxu0 0.0
      %647 = vmatprep.subr.mxu0 0.0
      %648 = vmatpush1.msra.mxu0 0.0
      %649 = vmatprep.mubr.f32.mxu0 0.0
      %650 = vmatmul.mubr.f32.gmra.mrb[0].mxu0 %v583
      %v651 = vpop.f32.mrb[0].mxu0
      %v652 = vadd.f32 %v579, %v651
      %v653 = vpop.f32.mrb[0].mxu0
      %654 = vdwg.mxu0
      %v655 = vmax.f32 %v652, 0.0
      %v656 = vld [vmem:[%s7] sm:$0xff]
      %v657 = vld [vmem:[%s7 + $0x8] sm:$0xff]
      %v658 = vld [vmem:[%s7 + $0x10] sm:$0xff]
      %v659 = vld [vmem:[%s7 + $0x18] sm:$0xff]
      %v660 = vld [vmem:[%s8] sm:$0x1]
      %v662 = vlaneseq
      %v663 = vshrl.u32 %v662, 7
      %v664 = vsub.s32 0, %v663
      %v665 = vrot.slane %v660, %v664
      %vm667 = vcmask 261120
      %v669 = vsel %vm667, %v655, 0
      %671 = vmatprep.subr.mxu0 0.0
      %672 = vmatpush1.msra.mxu0 %v656
      %673 = vmatprep.subr.mxu0 0.0
      %674 = vmatpush1.msra.mxu0 %v657
      %675 = vmatprep.subr.mxu0 0.0
      %676 = vmatpush1.msra.mxu0 %v658
      %677 = vmatprep.subr.mxu0 0.0
      %678 = vmatpush1.msra.mxu0 %v659
      %679 = vmatprep.subr.mxu0 0.0
      %680 = vmatpush1.msra.mxu0 0.0
      %681 = vmatprep.subr.mxu0 0.0
      %682 = vmatpush1.msra.mxu0 0.0
      %683 = vmatprep.subr.mxu0 0.0
      %684 = vmatpush1.msra.mxu0 0.0
      %685 = vmatprep.subr.mxu0 0.0
      %686 = vmatpush1.msra.mxu0 0.0
      %687 = vmatprep.subr.mxu0 0.0
      %688 = vmatpush1.msra.mxu0 0.0
      %689 = vmatprep.subr.mxu0 0.0
      %690 = vmatpush1.msra.mxu0 0.0
      %691 = vmatprep.subr.mxu0 0.0
      %692 = vmatpush1.msra.mxu0 0.0
      %693 = vmatprep.subr.mxu0 0.0
      %694 = vmatpush1.msra.mxu0 0.0
      %695 = vmatprep.subr.mxu0 0.0
      %696 = vmatpush1.msra.mxu0 0.0
      %697 = vmatprep.subr.mxu0 0.0
      %698 = vmatpush1.msra.mxu0 0.0
      %699 = vmatprep.subr.mxu0 0.0
      %700 = vmatpush1.msra.mxu0 0.0
      %701 = vmatprep.subr.mxu0 0.0
      %702 = vmatpush1.msra.mxu0 0.0
      %703 = vmatprep.subr.mxu0 0.0
      %704 = vmatpush1.msra.mxu0 0.0
      %705 = vmatprep.subr.mxu0 0.0
      %706 = vmatpush1.msra.mxu0 0.0
      %707 = vmatprep.subr.mxu0 0.0
      %708 = vmatpush1.msra.mxu0 0.0
      %709 = vmatprep.subr.mxu0 0.0
      %710 = vmatpush1.msra.mxu0 0.0
      %711 = vmatprep.subr.mxu0 0.0
      %712 = vmatpush1.msra.mxu0 0.0
      %713 = vmatprep.subr.mxu0 0.0
      %714 = vmatpush1.msra.mxu0 0.0
      %715 = vmatprep.subr.mxu0 0.0
      %716 = vmatpush1.msra.mxu0 0.0
      %717 = vmatprep.subr.mxu0 0.0
      %718 = vmatpush1.msra.mxu0 0.0
      %719 = vmatprep.subr.mxu0 0.0
      %720 = vmatpush1.msra.mxu0 0.0
      %721 = vmatprep.subr.mxu0 0.0
      %722 = vmatpush1.msra.mxu0 0.0
      %723 = vmatprep.subr.mxu0 0.0
      %724 = vmatpush1.msra.mxu0 0.0
      %725 = vmatprep.subr.mxu0 0.0
      %726 = vmatpush1.msra.mxu0 0.0
      %727 = vmatprep.subr.mxu0 0.0
      %728 = vmatpush1.msra.mxu0 0.0
      %729 = vmatprep.subr.mxu0 0.0
      %730 = vmatpush1.msra.mxu0 0.0
      %731 = vmatprep.subr.mxu0 0.0
      %732 = vmatpush1.msra.mxu0 0.0
      %733 = vmatprep.subr.mxu0 0.0
      %734 = vmatpush1.msra.mxu0 0.0
      %735 = vmatprep.mubr.f32.mxu0 0.0
      %736 = vmatmul.mubr.f32.gmra.mrb[0].mxu0 %v669
      %v737 = vpop.f32.mrb[0].mxu0
      %v738 = vadd.f32 %v665, %v737
      %v739 = vpop.f32.mrb[0].mxu0
      %740 = vdwg.mxu0
      %v741 = vld [vmem:[%s9] sm:$0xff]
      %v742 = vld [vmem:[%s9 + $0x8] sm:$0xff]
      %v743 = vld [vmem:[%s9 + $0x10] sm:$0xff]
      %v744 = vld [vmem:[%s9 + $0x18] sm:$0xff]
      %v745 = vld [vmem:[%s10] sm:$0x3]
      %v747 = vlaneseq
      %v748 = vshrl.u32 %v747, 7
      %v749 = vsub.s32 0, %v748
      %v750 = vrot.slane %v745, %v749
      %v751 = vlaneseq
      %v752 = vshrl.u32 %v751, 7
      %v753 = vsub.s32 1, %v752
      %v754 = vrot.slane %v745, %v753
      %v758 = vsel %vm394, %v738, 0
      %760 = vmatprep.subr.mxu0 %v742
      %761 = vmatpush1.msra.mxu0 %v741
      %762 = vmatprep.subr.mxu0 %v744
      %763 = vmatpush1.msra.mxu0 %v743
      %764 = vmatprep.subr.mxu0 0.0
      %765 = vmatpush1.msra.mxu0 0.0
      %766 = vmatprep.subr.mxu0 0.0
      %767 = vmatpush1.msra.mxu0 0.0
      %768 = vmatprep.subr.mxu0 0.0
      %769 = vmatpush1.msra.mxu0 0.0
      %770 = vmatprep.subr.mxu0 0.0
      %771 = vmatpush1.msra.mxu0 0.0
      %772 = vmatprep.subr.mxu0 0.0
      %773 = vmatpush1.msra.mxu0 0.0
      %774 = vmatprep.subr.mxu0 0.0
      %775 = vmatpush1.msra.mxu0 0.0
      %776 = vmatprep.subr.mxu0 0.0
      %777 = vmatpush1.msra.mxu0 0.0
      %778 = vmatprep.subr.mxu0 0.0
      %779 = vmatpush1.msra.mxu0 0.0
      %780 = vmatprep.subr.mxu0 0.0
      %781 = vmatpush1.msra.mxu0 0.0
      %782 = vmatprep.subr.mxu0 0.0
      %783 = vmatpush1.msra.mxu0 0.0
      %784 = vmatprep.subr.mxu0 0.0
      %785 = vmatpush1.msra.mxu0 0.0
      %786 = vmatprep.subr.mxu0 0.0
      %787 = vmatpush1.msra.mxu0 0.0
      %788 = vmatprep.subr.mxu0 0.0
      %789 = vmatpush1.msra.mxu0 0.0
      %790 = vmatprep.subr.mxu0 0.0
      %791 = vmatpush1.msra.mxu0 0.0
      %792 = vmatprep.subr.mxu0 0.0
      %793 = vmatpush1.msra.mxu0 0.0
      %794 = vmatprep.subr.mxu0 0.0
      %795 = vmatpush1.msra.mxu0 0.0
      %796 = vmatprep.subr.mxu0 0.0
      %797 = vmatpush1.msra.mxu0 0.0
      %798 = vmatprep.subr.mxu0 0.0
      %799 = vmatpush1.msra.mxu0 0.0
      %800 = vmatprep.subr.mxu0 0.0
      %801 = vmatpush1.msra.mxu0 0.0
      %802 = vmatprep.subr.mxu0 0.0
      %803 = vmatpush1.msra.mxu0 0.0
      %804 = vmatprep.subr.mxu0 0.0
      %805 = vmatpush1.msra.mxu0 0.0
      %806 = vmatprep.subr.mxu0 0.0
      %807 = vmatpush1.msra.mxu0 0.0
      %808 = vmatprep.subr.mxu0 0.0
      %809 = vmatpush1.msra.mxu0 0.0
      %810 = vmatprep.subr.mxu0 0.0
      %811 = vmatpush1.msra.mxu0 0.0
      %812 = vmatprep.subr.mxu0 0.0
      %813 = vmatpush1.msra.mxu0 0.0
      %814 = vmatprep.subr.mxu0 0.0
      %815 = vmatpush1.msra.mxu0 0.0
      %816 = vmatprep.subr.mxu0 0.0
      %817 = vmatpush1.msra.mxu0 0.0
      %818 = vmatprep.subr.mxu0 0.0
      %819 = vmatpush1.msra.mxu0 0.0
      %820 = vmatprep.subr.mxu0 0.0
      %821 = vmatpush1.msra.mxu0 0.0
      %822 = vmatprep.subr.mxu0 0.0
      %823 = vmatpush1.msra.mxu0 0.0
      %824 = vmatprep.mubr.f32.mxu0 0.0
      %825 = vmatmul.mubr.f32.gmra.mrb[0].mxu0 %v758
      %v826 = vpop.f32.mrb[0].mxu0
      %v827 = vadd.f32 %v750, %v826
      %v828 = vpop.f32.mrb[0].mxu0
      %v829 = vadd.f32 %v754, %v828
      %830 = vdwg.mxu0
      %v833 = vcombine.low %v827, %v829
      %v835 = vunpack.c.l.s4 1983009808
      %v836 = vunpack.c.0.s8 %v835
      %v837 = vlaneseq
      %v838 = vshrl.u32 %v837, 7
      %v839 = vsub.s32 %v836, %v838
      %v840 = vrot.slane %v833, %v839
      %842 = vst [vmem:[%s383] sm:$0xf] %v840
      %p843 = scmp.lt.s32.totalorder %s22, 1
      %s844 = scalar_select %p843, %s22, 1
      %s845 = smul.addr %s844, 2
      %s846 = smul.addr %s845, 2
      %s847 = scalar_lea.vmem %s11, %s846
      // Predicated region
      $region65: #{siamese_forward.1} parent=63 // pred_check
        %p848 = pneg %p276
      $region66: #{siamese_forward.1} parent=63 // pred_check_branch
        %850 = sbr.rel (%p848) target = $region68
      $region67: #{siamese_forward.1} parent=63 // pred_region
        _
      $region68: #{siamese_forward.1} parent=63 // pred_fallthru
        _
    $region64: #{siamese_forward.1} parent=5 // pred_fallthru
      _
    %p851 = scmp.le.s32.totalorder 2, %s17
    // Predicated region
    $region69: #{siamese_forward.1} parent=5 // pred_check
      %p852 = pneg %p851
    $region70: #{siamese_forward.1} parent=5 // pred_check_branch
      %854 = sbr.rel (%p852) target = $region72
    $region71: #{siamese_forward.1} parent=5 // pred_region
      %s855 = ssub.s32 %s17, 2
      // Predicated region
      $region73: #{siamese_forward.1} parent=71 // pred_check
        %p856 = pneg %p282
      $region74: #{siamese_forward.1} parent=71 // pred_check_branch
        %858 = sbr.rel (%p856) target = $region76
      $region75: #{siamese_forward.1} parent=71 // pred_region
        %p859 = scmp.lt.s32.totalorder %s23, 1
        %s860 = scalar_select %p859, %s23, 1
        %s861 = smul.addr %s860, 2
        %s862 = smul.addr %s861, 2
        %s863 = scalar_lea.vmem %s11, %s862
      $region76: #{siamese_forward.1} parent=71 // pred_fallthru
        _
    $region72: #{siamese_forward.1} parent=5 // pred_fallthru
      _
  $region6: #{siamese_forward.1} parent=0 // loop_footer
    %s21 = sadd.s32 1, %s17
  $region7: #{siamese_forward.1} parent=0 // loop_footer_branch
    %16 = sbr.rel target = $region3
  $region8: #{siamese_forward.1} parent=0 // loop_exit
    _

</llo_original>
